<compile_context>
chip_gen: v6e
topology: v6e:2x2x1
jax: 0.10.0
libtpu: 0.0.40
codegen_flags: <defaults>
</compile_context>

<pallas_src>
import functools

import jax
import jax.numpy as jnp
from jax import lax
from jax.experimental import pallas as pl
from jax.experimental.pallas import tpu as pltpu


# ------------------------ generation-aware VMEM budgets -----------------------

def _vmem_budgets():
    """Returns (vmem_limit_bytes, per-kernel I/O tile budget).

    v7x has only 64 MiB physical VMEM per TensorCore, so cap lower there;
    v5e/v6e have 128 MiB and can take the larger budget."""
    try:
        cap = int(pltpu.get_tpu_info().vmem_capacity_bytes)
    except Exception:
        cap = 64 * 1024 * 1024                       # conservative (v7x-sized) default
    if cap <= 64 * 1024 * 1024:                      # v7x
        return 40 * 1024 * 1024, 20 * 1024 * 1024
    return 48 * 1024 * 1024, 32 * 1024 * 1024        # v5e / v6e


# 512-1024-row tiles already reach ~85% of the HBM roofline; bigger only adds
# VMEM pressure.
_MAX_BLOCK_ROWS = 1024


def _choose_block_rows(n_rows, hidden, *, n_io, n_f32_temps, itemsize, tile_budget):
    """Largest row tile whose working set fits the budget: double-buffered I/O
    blocks PLUS the per-tile f32 temporaries the kernel materializes.  Also keeps
    at least 2 grid steps (DMA/compute overlap; v7x has 2 TCs to shard over)."""
    if n_rows <= 8:
        return n_rows                                 # full-dim block
    bytes_per_row = n_io * 2 * hidden * itemsize + n_f32_temps * hidden * 4
    target = tile_budget // max(1, bytes_per_row)
    target = min(target, _MAX_BLOCK_ROWS)
    min_steps = 8 if n_rows >= 4096 else 2            # pipelining / megacore
    target = min(target, pl.cdiv(n_rows, min_steps))
    target = max(8, (target // 8) * 8)                # sublane-dense rows
    return min(target, n_rows)


# ----------------------------- LayerNorm kernel -------------------------------

def _layernorm_kernel(x_ref, a_ref, b_ref, o_ref, *, eps):
    x = x_ref[...].astype(jnp.float32)                # (bm, H); stats need f32
    h = x.shape[-1]
    mean = jnp.mean(x, axis=-1, keepdims=True)
    xc = x - mean
    # torch.Tensor.std uses the unbiased (N-1) estimator; eps is added to std.
    std = jnp.sqrt(jnp.sum(xc * xc, axis=-1, keepdims=True) * (1.0 / float(h - 1)))
    inv = pl.reciprocal(std + eps)                    # one per-row reciprocal
    y = a_ref[...].astype(jnp.float32) * (xc * inv) + b_ref[...].astype(jnp.float32)
    o_ref[...] = y.astype(o_ref.dtype)


def layernorm(x2d, a_2, b_2, *, eps, block_rows=None):
    n, h = x2d.shape
    vmem_limit, tile_budget = _vmem_budgets()
    if block_rows is None:
        block_rows = _choose_block_rows(n, h, n_io=2, n_f32_temps=3,
                                        itemsize=x2d.dtype.itemsize,
                                        tile_budget=tile_budget)
    grid = (pl.cdiv(n, block_rows),)
    return pl.pallas_call(
        functools.partial(_layernorm_kernel, eps=eps),
        out_shape=jax.ShapeDtypeStruct((n, h), x2d.dtype),
        grid_spec=pltpu.PrefetchScalarGridSpec(
            num_scalar_prefetch=0,
            grid=grid,
            in_specs=[
                pl.BlockSpec((block_rows, h), lambda i: (i, 0)),
                pl.BlockSpec((1, h), lambda i: (0, 0)),
                pl.BlockSpec((1, h), lambda i: (0, 0)),
            ],
            out_specs=pl.BlockSpec((block_rows, h), lambda i: (i, 0)),
        ),
        compiler_params=pltpu.CompilerParams(
            dimension_semantics=("parallel",),
            vmem_limit_bytes=vmem_limit,
        ),
    )(x2d, a_2.reshape(1, h), b_2.reshape(1, h))


# ------------------- fused dropout + residual add (training) ------------------

def _dropout_residual_kernel(x_ref, y_ref, bits_ref, o_ref, *, threshold, inv_keep):
    # Inverted dropout on the sublayer output y, then residual add with x.
    # Arithmetic stays in the I/O dtype (bf16 stays bf16 on v6e/v7x); only the
    # LayerNorm statistics need f32.
    y = y_ref[...]
    keep = bits_ref[...] >= jnp.uint32(threshold)     # P(keep) = 1 - p
    y = jnp.where(keep, y * jnp.asarray(inv_keep, y.dtype), jnp.zeros_like(y))
    o_ref[...] = x_ref[...] + y


def dropout_residual_add(x2d, y2d, bits, *, p, block_rows=None):
    n, h = x2d.shape
    vmem_limit, tile_budget = _vmem_budgets()
    if block_rows is None:
        block_rows = _choose_block_rows(n, h, n_io=4, n_f32_temps=2,
                                        itemsize=x2d.dtype.itemsize,
                                        tile_budget=tile_budget)
    grid = (pl.cdiv(n, block_rows),)
    threshold = min(int(round(p * 2.0 ** 32)), 2 ** 32 - 1)
    row_spec = pl.BlockSpec((block_rows, h), lambda i: (i, 0))
    return pl.pallas_call(
        functools.partial(_dropout_residual_kernel,
                          threshold=threshold, inv_keep=1.0 / (1.0 - p)),
        out_shape=jax.ShapeDtypeStruct((n, h), x2d.dtype),
        grid_spec=pltpu.PrefetchScalarGridSpec(
            num_scalar_prefetch=0,
            grid=grid,
            in_specs=[row_spec, row_spec, row_spec],
            out_specs=row_spec,
        ),
        compiler_params=pltpu.CompilerParams(
            dimension_semantics=("parallel",),
            vmem_limit_bytes=vmem_limit,
        ),
    )(x2d, y2d, bits)


# -------------------- generic path (arbitrary sublayer callable) --------------

def sublayer_connection(x, sublayer_fn, a_2, b_2, *, eps=1e-6, p=0.0,
                        training=False, rng_key=None, block_rows=None):
    """x: (batch, seq, hidden).  sublayer_fn: arbitrary callable (plain JAX glue)."""
    b, s, h = x.shape
    x2d = x.reshape(b * s, h)
    normed = layernorm(x2d, a_2, b_2, eps=eps, block_rows=block_rows)
    sub_out = sublayer_fn(normed.reshape(b, s, h)).reshape(b * s, h).astype(x.dtype)
    if training and p > 0.0:
        if rng_key is None:
            rng_key = jax.random.PRNGKey(0)
        # TODO(synk): on real hardware the uint32 stream could come from the
        # in-kernel pltpu.prng_* hardware PRNG (saves one full-tensor HBM read),
        # but that primitive has no CPU/interpret lowering, so bits are drawn
        # with jax.random here and fused with the residual add in one kernel.
        bits = jax.random.bits(rng_key, (b * s, h), dtype=jnp.uint32)
        out = dropout_residual_add(x2d, sub_out, bits, p=p, block_rows=block_rows)
    else:
        # Eval / p == 0: dropout is the identity.  Plain JAX add so XLA fuses it
        # into the sublayer's epilogue (no standalone elementwise pallas_call).
        out = x2d + sub_out
    return out.reshape(b, s, h)


# ------------- fused path: LayerNorm -> (x@W + b) -> dropout -> +x ------------

def _fused_ln_linear_kernel(xrow_ref, w_ref, bias_ref, a_ref, b_ref, xres_ref,
                            *rest, eps, threshold, inv_keep, apply_dropout):
    if apply_dropout:
        bits_ref, o_ref = rest
    else:
        (o_ref,) = rest
    x = xrow_ref[...].astype(jnp.float32)             # (tm, K) full hidden rows
    k = x.shape[-1]
    mean = jnp.mean(x, axis=-1, keepdims=True)
    xc = x - mean
    std = jnp.sqrt(jnp.sum(xc * xc, axis=-1, keepdims=True) * (1.0 / float(k - 1)))
    inv = pl.reciprocal(std + eps)
    normed = (a_ref[...].astype(jnp.float32) * (xc * inv)
              + b_ref[...].astype(jnp.float32)).astype(w_ref.dtype)
    # MXU: (tm, K) @ (K, tn); K is carried whole so there is no accumulation axis.
    y = jnp.dot(normed, w_ref[...], preferred_element_type=jnp.float32,
                precision=lax.Precision.HIGHEST)
    y = y + bias_ref[...].astype(jnp.float32)
    if apply_dropout:
        keep = bits_ref[...] >= jnp.uint32(threshold)
        y = jnp.where(keep, y * inv_keep, 0.0)
    o_ref[...] = (xres_ref[...].astype(jnp.float32) + y).astype(o_ref.dtype)


def sublayer_connection_linear(x, W, bias, a_2, b_2, *, eps=1e-6, p=0.0,
                               training=False, rng_key=None,
                               block_m=None, block_n=None):
    """Fused single-kernel path for a known linear sublayer.  Removes the two
    full-tensor HBM round trips (`normed`, `sub_out`) the generic path pays."""
    b, s, h = x.shape
    kdim, n_out = W.shape
    assert kdim == h and n_out == h, "residual add requires a square projection"
    m = b * s
    x2d = x.reshape(m, h)
    vmem_limit, tile_budget = _vmem_budgets()
    if block_m is None:
        block_m = _choose_block_rows(m, h, n_io=3, n_f32_temps=4,
                                     itemsize=x2d.dtype.itemsize,
                                     tile_budget=tile_budget // 2)
    if block_n is None:
        block_n = h if h <= 512 else 512              # 512 keeps lanes dense (mult of 128)
    grid = (pl.cdiv(m, block_m), pl.cdiv(h, block_n))

    in_specs = [
        pl.BlockSpec((block_m, h), lambda i, j: (i, 0)),        # x rows for LN (reused over j)
        pl.BlockSpec((h, block_n), lambda i, j: (0, j)),        # W column tile
        pl.BlockSpec((1, block_n), lambda i, j: (0, j)),        # bias
        pl.BlockSpec((1, h), lambda i, j: (0, 0)),              # a_2
        pl.BlockSpec((1, h), lambda i, j: (0, 0)),              # b_2
        pl.BlockSpec((block_m, block_n), lambda i, j: (i, j)),  # x for residual add
    ]
    operands = [x2d, W, bias.reshape(1, h), a_2.reshape(1, h), b_2.reshape(1, h), x2d]

    apply_dropout = bool(training and p > 0.0)
    threshold, inv_keep = 0, 1.0
    if apply_dropout:
        threshold = min(int(round(p * 2.0 ** 32)), 2 ** 32 - 1)
        inv_keep = 1.0 / (1.0 - p)
        if rng_key is None:
            rng_key = jax.random.PRNGKey(0)
        bits = jax.random.bits(rng_key, (m, h), dtype=jnp.uint32)
        in_specs.append(pl.BlockSpec((block_m, block_n), lambda i, j: (i, j)))
        operands.append(bits)

    out2d = pl.pallas_call(
        functools.partial(_fused_ln_linear_kernel, eps=eps, threshold=threshold,
                          inv_keep=inv_keep, apply_dropout=apply_dropout),
        out_shape=jax.ShapeDtypeStruct((m, h), x.dtype),
        grid_spec=pltpu.PrefetchScalarGridSpec(
            num_scalar_prefetch=0,
            grid=grid,
            in_specs=in_specs,
            out_specs=pl.BlockSpec((block_m, block_n), lambda i, j: (i, j)),
        ),
        compiler_params=pltpu.CompilerParams(
            dimension_semantics=("parallel", "parallel"),
            vmem_limit_bytes=vmem_limit,
        ),
    )(*operands)
    return out2d.reshape(b, s, h)


# ------------------------------------ main ------------------------------------

if __name__ == "__main__":
    B, S, H = 2, 8, 32
    key = jax.random.PRNGKey(0)
    kx, kw, kd = jax.random.split(key, 3)

    x = jax.random.normal(kx, (B, S, H), dtype=jnp.float32)

    # LayerNorm params (deterministic init, as in the module's __init__).
    a_2 = jnp.ones((H,), jnp.float32)
    b_2 = jnp.zeros((H,), jnp.float32)

    # Example sublayer: a deterministic linear projection.
    W = jax.random.normal(kw, (H, H), dtype=jnp.float32) * 0.05
    bias = jnp.zeros((H,), jnp.float32)
    sublayer_fn = lambda t: jnp.dot(t, W, precision=lax.Precision.HIGHEST) + bias

    # Pure-JAX reference (PyTorch semantics: unbiased std, eps added to std).
    eps = 1e-6
    mean = jnp.mean(x, axis=-1, keepdims=True)
    xc = x - mean
    std = jnp.sqrt(jnp.sum(xc * xc, axis=-1, keepdims=True) / (H - 1))
    normed_ref = a_2 * xc / (std + eps) + b_2
    sub_ref = sublayer_fn(normed_ref)
    ref_eval = x + sub_ref

    # --- generic path, eval mode (dropout = identity) ---
    out = sublayer_connection(x, sublayer_fn, a_2, b_2, eps=eps, p=0.1, training=False)
    out = jax.block_until_ready(out)
    assert jnp.allclose(out, ref_eval, atol=1e-4, rtol=1e-4), "generic eval mismatch"

    # --- generic path, training mode: each element is either the kept (scaled)
    #     value or the residual alone ---
    # TODO(synk): the dropout mask stream is semantically equivalent to torch's
    # but not bitwise identical (different RNG).
    p_train = 0.25
    out_tr = sublayer_connection(x, sublayer_fn, a_2, b_2, eps=eps, p=p_train,
                                 training=True, rng_key=kd)
    out_tr = jax.block_until_ready(out_tr)
    kept = x + sub_ref / (1.0 - p_train)
    ok = (jnp.isclose(out_tr, kept, atol=1e-4, rtol=1e-4)
          | jnp.isclose(out_tr, x, atol=1e-4, rtol=1e-4))
    assert bool(jnp.all(ok)), "generic training output not in {kept, residual}"

    # --- fused LN + linear + dropout + residual path ---
    out_f = sublayer_connection_linear(x, W, bias, a_2, b_2, eps=eps, p=0.1,
                                       training=False)
    out_f = jax.block_until_ready(out_f)
    assert jnp.allclose(out_f, ref_eval, atol=1e-4, rtol=1e-4), "fused eval mismatch"

    out_ftr = sublayer_connection_linear(x, W, bias, a_2, b_2, eps=eps, p=p_train,
                                         training=True, rng_key=kd)
    out_ftr = jax.block_until_ready(out_ftr)
    ok_f = (jnp.isclose(out_ftr, kept, atol=1e-4, rtol=1e-4)
            | jnp.isclose(out_ftr, x, atol=1e-4, rtol=1e-4))
    assert bool(jnp.all(ok_f)), "fused training output not in {kept, residual}"

    print("KERNEL_OK")
</pallas_src>

<mosaic_0001>
module attributes {stable_mosaic.version = 11 : i64} {
  func.func @_layernorm_kernel(%arg0: i32, %arg1: memref<8x32xf32, #tpu.memory_space<vmem>>, %arg2: memref<1x32xf32, #tpu.memory_space<vmem>>, %arg3: memref<1x32xf32, #tpu.memory_space<vmem>>, %arg4: memref<8x32xf32, #tpu.memory_space<vmem>>) attributes {dimension_semantics = [#tpu.dimension_semantics<parallel>], iteration_bounds = array<i64: 2>, scalar_prefetch = 0 : i64, scratch_operands = 0 : i64, tpu.core_type = #tpu.core_type<tc>, window_params = [{transform_indices = @transform_0, window_bounds = array<i64: 8, 32>}, {pipeline_mode = #tpu.pipeline_mode<synchronous>, transform_indices = @transform_1, window_bounds = array<i64: 1, 32>}, {pipeline_mode = #tpu.pipeline_mode<synchronous>, transform_indices = @transform_2, window_bounds = array<i64: 1, 32>}, {transform_indices = @transform_3, window_bounds = array<i64: 8, 32>}]} {
    %c0 = arith.constant 0 : index
    %c0_0 = arith.constant 0 : index
    %0 = vector.load %arg1[%c0, %c0_0] : memref<8x32xf32, #tpu.memory_space<vmem>>, vector<8x32xf32>
    %cst = arith.constant dense<0.000000e+00> : vector<8xf32>
    %1 = vector.multi_reduction <add>, %0, %cst [1] : vector<8x32xf32> to vector<8xf32>
    %2 = vector.shape_cast %1 : vector<8xf32> to vector<8x1xf32>
    %cst_1 = arith.constant 3.200000e+01 : f32
    %3 = vector.broadcast %cst_1 : f32 to vector<8x1xf32>
    %4 = arith.divf %2, %3 : vector<8x1xf32>
    %5 = vector.broadcast %4 : vector<8x1xf32> to vector<8x32xf32>
    %6 = arith.subf %0, %5 : vector<8x32xf32>
    %7 = arith.mulf %6, %6 : vector<8x32xf32>
    %cst_2 = arith.constant dense<0.000000e+00> : vector<8xf32>
    %8 = vector.multi_reduction <add>, %7, %cst_2 [1] : vector<8x32xf32> to vector<8xf32>
    %9 = vector.shape_cast %8 : vector<8xf32> to vector<8x1xf32>
    %cst_3 = arith.constant 0.0322580636 : f32
    %10 = vector.broadcast %cst_3 : f32 to vector<8x1xf32>
    %11 = arith.mulf %9, %10 : vector<8x1xf32>
    %12 = math.sqrt %11 : vector<8x1xf32>
    %cst_4 = arith.constant 9.99999997E-7 : f32
    %13 = vector.broadcast %cst_4 : f32 to vector<8x1xf32>
    %14 = arith.addf %12, %13 : vector<8x1xf32>
    %15 = tpu.reciprocal %14 : vector<8x1xf32> -> vector<8x1xf32>
    %c0_5 = arith.constant 0 : index
    %c0_6 = arith.constant 0 : index
    %16 = vector.load %arg2[%c0_5, %c0_6] : memref<1x32xf32, #tpu.memory_space<vmem>>, vector<1x32xf32>
    %17 = vector.broadcast %15 : vector<8x1xf32> to vector<8x32xf32>
    %18 = arith.mulf %6, %17 : vector<8x32xf32>
    %19 = vector.broadcast %16 : vector<1x32xf32> to vector<8x32xf32>
    %20 = arith.mulf %19, %18 : vector<8x32xf32>
    %c0_7 = arith.constant 0 : index
    %c0_8 = arith.constant 0 : index
    %21 = vector.load %arg3[%c0_7, %c0_8] : memref<1x32xf32, #tpu.memory_space<vmem>>, vector<1x32xf32>
    %22 = vector.broadcast %21 : vector<1x32xf32> to vector<8x32xf32>
    %23 = arith.addf %20, %22 : vector<8x32xf32>
    %c0_9 = arith.constant 0 : index
    %c0_10 = arith.constant 0 : index
    %24 = vector.load %arg4[%c0_9, %c0_10] : memref<8x32xf32, #tpu.memory_space<vmem>>, vector<8x32xf32>
    tpu.vector_store %arg4[%c0_9, %c0_10], %23 {strides = array<i32>} : memref<8x32xf32, #tpu.memory_space<vmem>>, vector<8x32xf32>,
    return
  }
  func.func @transform_0(%arg0: i32) -> (i32, i32) {
    %c0_i32 = arith.constant 0 : i32
    %c0_i32_0 = arith.constant 0 : i32
    return %arg0, %c0_i32 : i32, i32
  }
  func.func @transform_1(%arg0: i32) -> (i32, i32) {
    %c0_i32 = arith.constant 0 : i32
    %c0_i32_0 = arith.constant 0 : i32
    %c0_i32_1 = arith.constant 0 : i32
    return %c0_i32, %c0_i32_0 : i32, i32
  }
  func.func @transform_2(%arg0: i32) -> (i32, i32) {
    %c0_i32 = arith.constant 0 : i32
    %c0_i32_0 = arith.constant 0 : i32
    %c0_i32_1 = arith.constant 0 : i32
    return %c0_i32, %c0_i32_0 : i32, i32
  }
  func.func @transform_3(%arg0: i32) -> (i32, i32) {
    %c0_i32 = arith.constant 0 : i32
    %c0_i32_0 = arith.constant 0 : i32
    return %arg0, %c0_i32 : i32, i32
  }
}

</mosaic_0001>

<llo_original>
// kernel: tpu_custom_call.1
$region0: #{tpu_custom_call.1}
  #allocation0 [shape = 'u32[]', space=smem, size = 0x4, offset = 0x4, fixed_abs, tag = 'smem constant byte address 0x4 - core index']
  #allocation1 [shape = 'u32[144,128]{1,0:T(1,128)}', space=vmem, size = 0x12000, scoped, tag = 'internal scratch']
  %s0 = inlined_call_operand.hbm [shape: f32[16,32], index: 0, kind: input, shape index: {}]
  %s1 = inlined_call_operand.vmem [shape: f32[1,32], index: 1, kind: input, shape index: {}]
  %s2 = inlined_call_operand.vmem [shape: f32[1,32], index: 2, kind: input, shape index: {}]
  %s3 = inlined_call_operand.hbm [shape: f32[16,32], index: 3, kind: output, shape index: {}]
  %s4 = sld [smem:[#allocation0]]
  $region49: #{tpu_custom_call.1} parent=0
    _
  %s6 = ssub.s32 1, %s4
  %s7 = scalar_select 0, %s6, %s4
  $region1: #{tpu_custom_call.1} parent=0
    #allocation2 [shape = 'u8[8192]{0}', space=vmem, size = 0x2000, scoped, tag = 'input window, operand 0']
    #allocation3 [shape = 's32[2]{0}', space=sflag, size = 0x8, scoped, tag = 'scoped memory for tpu_custom_call.1']
    #allocation4 [shape = 's32[2]{0}', space=sflag, size = 0x8, scoped, tag = 'scoped memory for tpu_custom_call.1']
    #allocation5 [shape = 'u8[8192]{0}', space=vmem, size = 0x2000, scoped, tag = 'output window, operand 0']
    %8 = vsyncpa [#allocation3], 0
    %s9 = scalar_lea.sflag [#allocation3], 1
    %10 = vsyncpa %s9, 0
    %11 = vsyncpa [#allocation4], 0
    %s12 = scalar_lea.sflag [#allocation4], 1
    %13 = vsyncpa %s12, 0
    loop: start=0, step=1, limit=4
    $region2: #{tpu_custom_call.1} parent=1 // loop_pre_header
      _
    $region3: #{tpu_custom_call.1} parent=1 // loop_header
      %s15 = sphi 0, %s19
      %p16 = scmp.ge.s32.totalorder %s15, 4
      %s25 = sphi 0, %s27
      %s28 = sphi 0, %s25
      %s29 = sphi 0, %s28
      %s45 = sphi 0, %s29
      %s49 = sphi 0, %s49
      %s51 = sphi 0, %s49
      %s52 = sphi 0, %s51
      %s66 = sphi 0, %s52
      %s70 = sphi 0, %s70
      %s72 = sphi 0, %s70
      %s73 = sphi 0, %s72
      %s87 = sphi 0, %s73
      %s93 = sphi 0, %s95
      %s96 = sphi 0, %s93
      %s97 = sphi 0, %s96
      %s113 = sphi 0, %s97
    $region4: #{tpu_custom_call.1} parent=1 // loop_header_branch
      %18 = sbr.rel (%p16) target = $region8
    $region5: #{tpu_custom_call.1} parent=1 // loop_body
      %s20 = ssub.s32 %s15, 1
      %s21 = ssub.s32 %s15, 2
      %s22 = sadd.s32 %s15, 1
      %s23 = ssub.s32 %s15, %s22
      %p24 = scmp.eq.s32.totalorder %s23, 0
      %s26 = sadd.s32 %s25, 1
      %s27 = scalar_select %p24, %s25, %s26
      %p30 = pneg %p24
      %p31 = scmp.eq.s32.totalorder %s15, 1
      %p32 = por %p30, %p31
      %p33 = scmp.ne.s32.totalorder %s25, %s28
      %p34 = scmp.eq.s32.totalorder %s15, 0
      %p35 = por %p33, %p34
      %p36 = scmp.ne.s32.totalorder %s25, %s28
      %p37 = scmp.eq.s32.totalorder %s20, 1
      %p38 = por %p36, %p37
      %p39 = scmp.ne.s32.totalorder %s28, %s29
      %p40 = scmp.eq.s32.totalorder %s20, 0
      %p41 = por %p39, %p40
      %p42 = scmp.ne.s32.totalorder %s28, %s29
      %p43 = scmp.eq.s32.totalorder %s21, 1
      %p44 = por %p42, %p43
      %p46 = scmp.ne.s32.totalorder %s29, %s45
      %p47 = scmp.eq.s32.totalorder %s21, 0
      %p48 = por %p46, %p47
      %s50 = sadd.s32 %s49, 1
      %p53 = scmp.eq.s32.totalorder %s15, 1
      %p54 = scmp.ne.s32.totalorder %s49, %s51
      %p55 = scmp.eq.s32.totalorder %s15, 0
      %p56 = por %p54, %p55
      %p57 = scmp.ne.s32.totalorder %s49, %s51
      %p58 = scmp.eq.s32.totalorder %s20, 1
      %p59 = por %p57, %p58
      %p60 = scmp.ne.s32.totalorder %s51, %s52
      %p61 = scmp.eq.s32.totalorder %s20, 0
      %p62 = por %p60, %p61
      %p63 = scmp.ne.s32.totalorder %s51, %s52
      %p64 = scmp.eq.s32.totalorder %s21, 1
      %p65 = por %p63, %p64
      %p67 = scmp.ne.s32.totalorder %s52, %s66
      %p68 = scmp.eq.s32.totalorder %s21, 0
      %p69 = por %p67, %p68
      %s71 = sadd.s32 %s70, 1
      %p74 = scmp.eq.s32.totalorder %s15, 1
      %p75 = scmp.ne.s32.totalorder %s70, %s72
      %p76 = scmp.eq.s32.totalorder %s15, 0
      %p77 = por %p75, %p76
      %p78 = scmp.ne.s32.totalorder %s70, %s72
      %p79 = scmp.eq.s32.totalorder %s20, 1
      %p80 = por %p78, %p79
      %p81 = scmp.ne.s32.totalorder %s72, %s73
      %p82 = scmp.eq.s32.totalorder %s20, 0
      %p83 = por %p81, %p82
      %p84 = scmp.ne.s32.totalorder %s72, %s73
      %p85 = scmp.eq.s32.totalorder %s21, 1
      %p86 = por %p84, %p85
      %p88 = scmp.ne.s32.totalorder %s73, %s87
      %p89 = scmp.eq.s32.totalorder %s21, 0
      %p90 = por %p88, %p89
      %s91 = ssub.s32 %s15, %s22
      %p92 = scmp.eq.s32.totalorder %s91, 0
      %s94 = sadd.s32 %s93, 1
      %s95 = scalar_select %p92, %s93, %s94
      %p98 = pneg %p92
      %p99 = scmp.eq.s32.totalorder %s15, 1
      %p100 = por %p98, %p99
      %p101 = scmp.ne.s32.totalorder %s93, %s96
      %p102 = scmp.eq.s32.totalorder %s15, 0
      %p103 = por %p101, %p102
      %p104 = scmp.ne.s32.totalorder %s93, %s96
      %p105 = scmp.eq.s32.totalorder %s20, 1
      %p106 = por %p104, %p105
      %p107 = scmp.ne.s32.totalorder %s96, %s97
      %p108 = scmp.eq.s32.totalorder %s20, 0
      %p109 = por %p107, %p108
      %p110 = scmp.ne.s32.totalorder %s96, %s97
      %p111 = scmp.eq.s32.totalorder %s21, 1
      %p112 = por %p110, %p111
      %p114 = scmp.ne.s32.totalorder %s97, %s113
      %p115 = scmp.eq.s32.totalorder %s21, 0
      %p116 = por %p114, %p115
      %p117 = scmp.le.s32.totalorder 1, %s15
      %p118 = scmp.lt.s32.totalorder %s15, 3
      %p119 = pnand %p117, %p118
      %p120 = pneg %p119
      // Predicated region
      $region9: #{tpu_custom_call.1} parent=5 // pred_check
        _
      $region10: #{tpu_custom_call.1} parent=5 // pred_check_branch
        %122 = sbr.rel (%p119) target = $region12
      $region11: #{tpu_custom_call.1} parent=5 // pred_region
        %s123 = ssub.s32 %s15, 1
        // Predicated region
        $region13: #{tpu_custom_call.1} parent=11 // pred_check
          %p124 = pneg %p62
        $region14: #{tpu_custom_call.1} parent=11 // pred_check_branch
          %126 = sbr.rel (%p124) target = $region16
        $region15: #{tpu_custom_call.1} parent=11 // pred_region
          _
        $region16: #{tpu_custom_call.1} parent=11 // pred_fallthru
          _
        // Predicated region
        $region17: #{tpu_custom_call.1} parent=11 // pred_check
          %p127 = pneg %p83
        $region18: #{tpu_custom_call.1} parent=11 // pred_check_branch
          %129 = sbr.rel (%p127) target = $region20
        $region19: #{tpu_custom_call.1} parent=11 // pred_region
          _
        $region20: #{tpu_custom_call.1} parent=11 // pred_fallthru
          _
      $region12: #{tpu_custom_call.1} parent=5 // pred_fallthru
        _
      %p130 = scmp.lt.s32.totalorder %s15, 2
      // Predicated region
      $region21: #{tpu_custom_call.1} parent=5 // pred_check
        %p131 = pneg %p130
      $region22: #{tpu_custom_call.1} parent=5 // pred_check_branch
        %133 = sbr.rel (%p131) target = $region24
      $region23: #{tpu_custom_call.1} parent=5 // pred_region
        // Predicated region
        $region25: #{tpu_custom_call.1} parent=23 // pred_check
          %p134 = pneg %p35
        $region26: #{tpu_custom_call.1} parent=23 // pred_check_branch
          %136 = sbr.rel (%p134) target = $region28
        $region27: #{tpu_custom_call.1} parent=23 // pred_region
          %s137 = sand.u32 %s25, 1
          %s138 = scalar_lea.sflag [#allocation3], %s137
          %s139 = sand.u32 %s25, 1
          %s140 = smul.addr %s139, 8
          %s141 = scalar_lea.vmem [#allocation2], %s140
          %s143 = ssub.s32 128, 128
          %144 = vsyncadd %s138, %s143
          %s145 = smul.addr %s15, 128
          %s146 = scalar_lea.hbm %s0, %s145
          %s148 = sshll.u32 %s141, 4
          %s149 = int_to_ptr.vmem [resolvable:$true] %s148
          %151 = dma.hbm_to_vmem [thread:$0]  %s146, 128, %s149, %s138
        $region28: #{tpu_custom_call.1} parent=23 // pred_fallthru
          _
      $region24: #{tpu_custom_call.1} parent=5 // pred_fallthru
        _
      %p152 = scmp.le.s32.totalorder 1, %s15
      %p153 = scmp.lt.s32.totalorder %s15, 3
      %p154 = pnand %p152, %p153
      %p155 = pneg %p154
      // Predicated region
      $region29: #{tpu_custom_call.1} parent=5 // pred_check
        _
      $region30: #{tpu_custom_call.1} parent=5 // pred_check_branch
        %157 = sbr.rel (%p154) target = $region32
      $region31: #{tpu_custom_call.1} parent=5 // pred_region
        %s158 = ssub.s32 %s15, 1
        %s159 = sand.u32 %s28, 1
        %s160 = scalar_lea.sflag [#allocation3], %s159
        %s161 = sand.u32 %s28, 1
        %s162 = smul.addr %s161, 8
        %s163 = scalar_lea.vmem [#allocation2], %s162
        // Predicated region
        $region33: #{tpu_custom_call.1} parent=31 // pred_check
          %p164 = pneg %p41
        $region34: #{tpu_custom_call.1} parent=31 // pred_check_branch
          %166 = sbr.rel (%p164) target = $region36
        $region35: #{tpu_custom_call.1} parent=31 // pred_region
          %167 = dma.done %s160, 128
        $region36: #{tpu_custom_call.1} parent=31 // pred_fallthru
          _
        %s168 = sand.u32 %s28, 1
        %s169 = scalar_lea.sflag [#allocation3], %s168
        %s170 = sand.u32 %s28, 1
        %s171 = smul.addr %s170, 8
        %s172 = scalar_lea.vmem [#allocation2], %s171
        %p173 = pneg %p41
        %p174 = pneg %p38
        %p175 = pneg %p62
        %p176 = pneg %p59
        %p177 = pneg %p83
        %p178 = pneg %p80
        %p179 = pneg %p109
        %p180 = pneg %p106
        %s181 = sand.u32 %s96, 1
        %s182 = scalar_lea.sflag [#allocation4], %s181
        %s183 = sand.u32 %s96, 1
        %s184 = smul.addr %s183, 8
        %s185 = scalar_lea.vmem [#allocation5], %s184
        %v186 = vld [vmem:[%s163] sm:$0xff]
        %vm187 = vcmask 261120
        %v188 = vsel %vm187, %v186, 0.0
        %189 = vadd.xlane.f32.xlu0 %v188
        %v190 = vpop.xlane.xlu0 %189
        %v191 = vrcp.pop 32.0
        %v192 = vmul.f32 %v190, %v191
        %v193 = vsub.f32 %v186, %v192
        %v194 = vmul.f32 %v193, %v193
        %v195 = vsel %vm187, %v194, 0.0
        %196 = vadd.xlane.f32.xlu0 %v195
        %v197 = vpop.xlane.xlu0 %196
        %v198 = vmul.f32 %v197, 0.032258064
        %v199 = vrsqrt.pop %v198
        %v200 = vmul.f32 %v198, %v199
        %vm201 = vcmp.eq.f32.partialorder %v198, inf
        %v202 = vsel %vm201, %v198, %v200
        %vm203 = vcmp.eq.f32.partialorder %v198, 0.0
        %v204 = vand.u32 %v198, 2147483648
        %v205 = vsel %vm203, %v204, %v202
        %v206 = vadd.f32 %v205, 1e-06
        %v207 = vrcp.pop %v206
        %v208 = vld [vmem:[%s1] sm:$0x1]
        %v209 = vmul.f32 %v193, %v207
        %v211 = vlaneseq
        %v212 = vshrl.u32 %v211, 7
        %v213 = vsub.s32 0, %v212
        %v214 = vrot.slane %v208, %v213
        %v216 = vmul.f32 %v214, %v209
        %v217 = vld [vmem:[%s2] sm:$0x1]
        %v219 = vlaneseq
        %v220 = vshrl.u32 %v219, 7
        %v221 = vsub.s32 0, %v220
        %v222 = vrot.slane %v217, %v221
        %v224 = vadd.f32 %v216, %v222
        %225 = vst.msk [vmem:[%s185] sm:$0xff] %vm187, %v224
        %s226 = sand.u32 %s96, 1
        %s227 = scalar_lea.sflag [#allocation4], %s226
        %s228 = sand.u32 %s96, 1
        %s229 = smul.addr %s228, 8
        %s230 = scalar_lea.vmem [#allocation5], %s229
        // Predicated region
        $region37: #{tpu_custom_call.1} parent=31 // pred_check
          %p231 = pneg %p106
        $region38: #{tpu_custom_call.1} parent=31 // pred_check_branch
          %233 = sbr.rel (%p231) target = $region40
        $region39: #{tpu_custom_call.1} parent=31 // pred_region
          %s235 = ssub.s32 128, 128
          %236 = vsyncadd %s227, %s235
          %s237 = smul.addr %s20, 128
          %s238 = scalar_lea.hbm %s3, %s237
          %s240 = sshll.u32 %s230, 4
          %s241 = int_to_ptr.vmem [resolvable:$true] %s240
          %243 = dma.vmem_to_hbm [thread:$0]  %s241, 128, %s238, %s227
        $region40: #{tpu_custom_call.1} parent=31 // pred_fallthru
          _
      $region32: #{tpu_custom_call.1} parent=5 // pred_fallthru
        _
      %p244 = scmp.le.s32.totalorder 2, %s15
      // Predicated region
      $region41: #{tpu_custom_call.1} parent=5 // pred_check
        %p245 = pneg %p244
      $region42: #{tpu_custom_call.1} parent=5 // pred_check_branch
        %247 = sbr.rel (%p245) target = $region44
      $region43: #{tpu_custom_call.1} parent=5 // pred_region
        %s248 = ssub.s32 %s15, 2
        // Predicated region
        $region45: #{tpu_custom_call.1} parent=43 // pred_check
          %p249 = pneg %p112
        $region46: #{tpu_custom_call.1} parent=43 // pred_check_branch
          %251 = sbr.rel (%p249) target = $region48
        $region47: #{tpu_custom_call.1} parent=43 // pred_region
          %s252 = sand.u32 %s97, 1
          %s253 = scalar_lea.sflag [#allocation4], %s252
          %s254 = sand.u32 %s97, 1
          %s255 = smul.addr %s254, 8
          %s256 = scalar_lea.vmem [#allocation5], %s255
          %257 = dma.done %s253, 128
        $region48: #{tpu_custom_call.1} parent=43 // pred_fallthru
          _
      $region44: #{tpu_custom_call.1} parent=5 // pred_fallthru
        _
    $region6: #{tpu_custom_call.1} parent=1 // loop_footer
      %s19 = sadd.s32 1, %s15
    $region7: #{tpu_custom_call.1} parent=1 // loop_footer_branch
      %14 = sbr.rel target = $region3
    $region8: #{tpu_custom_call.1} parent=1 // loop_exit
      _
    %258 = vsyncpa [#allocation3], 1
    %s259 = scalar_lea.sflag [#allocation3], 1
    %260 = vsyncpa %s259, 1
    %261 = vsyncpa [#allocation4], 1
    %s262 = scalar_lea.sflag [#allocation4], 1
    %263 = vsyncpa %s262, 1

</llo_original>
